<compile_context>
chip_gen: v5e
topology: v5e:2x2
jax: 0.10.0
libtpu: 0.0.40
codegen_flags: <defaults>
</compile_context>

<pallas_src>
import jax
import jax.numpy as jnp
from jax.experimental import pallas as pl
from jax.experimental.pallas import tpu as pltpu


def _round_up(x, m):
    return (x + m - 1) // m * m


def _fa_kernel(x_ref, w_ref, b_ref, o_ref):
    # x_ref: (tile_m, K)
    # w_ref: (K, 2*tile_n)   == [Wy_tile | Wg_tile]
    # b_ref: (1, 2*tile_n)   == [by_tile | bg_tile]
    # o_ref: (tile_m, tile_n)
    tile_n = o_ref.shape[-1]
    z = jnp.dot(x_ref[...], w_ref[...],
                preferred_element_type=jnp.float32) + b_ref[...]
    ytilde = jnp.tanh(z[:, :tile_n])                 # Eq. 12
    g = jax.nn.sigmoid(z[:, tile_n:])                # Eq. 13
    o_ref[...] = (ytilde * g).astype(o_ref.dtype)    # Eq. 14


def prepare_fa_params(wy, by, wg, bg, *, tile_n):
    """One-time parameter prep (do OUTSIDE the hot path).

    wy/wg: (output_dim, input_dim) PyTorch nn.Linear layout; by/bg: (output_dim,).
    Returns:
      w_cat: (n_tiles, input_dim, 2*tile_n) — per-N-tile [Wy_tile | Wg_tile]
      b_cat: (n_tiles, 1, 2*tile_n)
    """
    output_dim, input_dim = wy.shape
    n_pad = _round_up(output_dim, tile_n)
    n_tiles = n_pad // tile_n
    pad_n = n_pad - output_dim

    def prep_w(w):
        wt = jnp.pad(w.T, ((0, 0), (0, pad_n)))                    # (K, n_pad)
        return wt.reshape(input_dim, n_tiles, tile_n).transpose(1, 0, 2)

    def prep_b(b):
        return jnp.pad(b, (0, pad_n)).reshape(n_tiles, 1, tile_n)

    w_cat = jnp.concatenate([prep_w(wy), prep_w(wg)], axis=-1)
    b_cat = jnp.concatenate([prep_b(by), prep_b(bg)], axis=-1)
    return w_cat, b_cat


def fa_network_prepared(x, w_cat, b_cat, output_dim, *, tile_m=None):
    """x: (B, input_dim); w_cat/b_cat from prepare_fa_params.
    Returns (B, output_dim)."""
    B, input_dim = x.shape
    n_tiles, k, two_tn = w_cat.shape
    assert k == input_dim
    tile_n = two_tn // 2

    # M tiling: multiple of 8 sublanes, capped at 256 so multi-step grids
    # pipeline x/out DMA behind the matmul (and shard across v7x's 2 TCs).
    if tile_m is None:
        tile_m = min(_round_up(max(B, 1), 8), 256)
    tile_m = max(8, _round_up(tile_m, 8))
    b_pad = _round_up(B, tile_m)
    if b_pad != B:
        x = jnp.pad(x, ((0, b_pad - B), (0, 0)))   # ragged-batch handling

    grid = (b_pad // tile_m, n_tiles)   # N inner => x tile reused across inner loop

    # Per-step VMEM footprint (f32), x2 for double buffering, with headroom,
    # clamped so the limit is valid on every generation.
    bytes_per_step = 4 * (tile_m * input_dim + input_dim * 2 * tile_n
                          + 2 * tile_n + tile_m * tile_n)
    vmem_bytes = int(min(48 * 1024 * 1024,
                         max(4 * bytes_per_step, 32 * 1024 * 1024)))

    out = pl.pallas_call(
        _fa_kernel,
        out_shape=jax.ShapeDtypeStruct((b_pad, n_tiles * tile_n), x.dtype),
        grid_spec=pltpu.PrefetchScalarGridSpec(
            num_scalar_prefetch=0,
            grid=grid,
            in_specs=[
                pl.BlockSpec((tile_m, input_dim), lambda i, j: (i, 0)),               # x
                pl.BlockSpec((None, input_dim, 2 * tile_n), lambda i, j: (j, 0, 0)),  # [Wy|Wg]
                pl.BlockSpec((None, 1, 2 * tile_n), lambda i, j: (j, 0, 0)),          # [by|bg]
            ],
            out_specs=pl.BlockSpec((tile_m, tile_n), lambda i, j: (i, j)),
        ),
        compiler_params=pltpu.CompilerParams(
            dimension_semantics=("parallel", "parallel"),
            vmem_limit_bytes=vmem_bytes,
        ),
    )(x, w_cat, b_cat)

    return out[:B, :output_dim]


def fa_network(x, wy, by, wg, bg, *, tile_m=None, tile_n=None):
    """Convenience wrapper: prep + call. Prefer prepare_fa_params once +
    fa_network_prepared inside a hot loop."""
    output_dim = wy.shape[0]
    if tile_n is None:
        tile_n = min(_round_up(output_dim, 128), 256)
    w_cat, b_cat = prepare_fa_params(wy, by, wg, bg, tile_n=tile_n)
    return fa_network_prepared(x, w_cat, b_cat, output_dim, tile_m=tile_m)


def fa_network_ref(x, wy, by, wg, bg):
    """Pure-JAX reference mirroring the PyTorch forward exactly."""
    ytilde = jnp.tanh(x @ wy.T + by)
    g = jax.nn.sigmoid(x @ wg.T + bg)
    return ytilde * g


if __name__ == "__main__":
    # --- Test 1: shapes consistent with the module (batch=8, in=32, out=32) ---
    B, input_dim, output_dim = 8, 32, 32

    key = jax.random.PRNGKey(0)
    kx, kwy, kby, kwg, kbg = jax.random.split(key, 5)

    x = jax.random.normal(kx, (B, input_dim), dtype=jnp.float32)
    bound = 1.0 / (input_dim ** 0.5)
    wy = jax.random.uniform(kwy, (output_dim, input_dim), jnp.float32, -bound, bound)
    by = jax.random.uniform(kby, (output_dim,), jnp.float32, -bound, bound)
    wg = jax.random.uniform(kwg, (output_dim, input_dim), jnp.float32, -bound, bound)
    bg = jax.random.uniform(kbg, (output_dim,), jnp.float32, -bound, bound)

    # One-time prep (transpose/concat/pad done once, outside the hot path).
    tile_n = min(_round_up(output_dim, 128), 256)
    w_cat, b_cat = prepare_fa_params(wy, by, wg, bg, tile_n=tile_n)

    out = fa_network_prepared(x, w_cat, b_cat, output_dim)
    out = jax.block_until_ready(out)

    ref = fa_network_ref(x, wy, by, wg, bg)
    assert out.shape == (B, output_dim)
    assert jnp.allclose(out, ref, atol=1e-5, rtol=1e-5), "mismatch vs reference (small)"

    # --- Test 2: ragged batch + multi-tile M/N grid (exercises padding path) ---
    B2, in2, out2 = 300, 160, 384
    k2 = jax.random.PRNGKey(1)
    kx2, kwy2, kby2, kwg2, kbg2 = jax.random.split(k2, 5)
    x2 = jax.random.normal(kx2, (B2, in2), dtype=jnp.float32)
    b2 = 1.0 / (in2 ** 0.5)
    wy2 = jax.random.uniform(kwy2, (out2, in2), jnp.float32, -b2, b2)
    by2 = jax.random.uniform(kby2, (out2,), jnp.float32, -b2, b2)
    wg2 = jax.random.uniform(kwg2, (out2, in2), jnp.float32, -b2, b2)
    bg2 = jax.random.uniform(kbg2, (out2,), jnp.float32, -b2, b2)

    out_big = jax.block_until_ready(fa_network(x2, wy2, by2, wg2, bg2))
    ref_big = fa_network_ref(x2, wy2, by2, wg2, bg2)
    assert out_big.shape == (B2, out2)
    assert jnp.allclose(out_big, ref_big, atol=1e-4, rtol=1e-4), "mismatch vs reference (tiled)"

    print("KERNEL_OK")
</pallas_src>

<mosaic_0001>
module attributes {stable_mosaic.version = 11 : i64} {
  func.func @_fa_kernel(%arg0: i32, %arg1: i32, %arg2: memref<8x32xf32, #tpu.memory_space<vmem>>, %arg3: memref<1x32x256xf32, #tpu.memory_space<vmem>>, %arg4: memref<1x1x256xf32, #tpu.memory_space<vmem>>, %arg5: memref<8x128xf32, #tpu.memory_space<vmem>>) attributes {dimension_semantics = [#tpu.dimension_semantics<parallel>, #tpu.dimension_semantics<parallel>], iteration_bounds = array<i64: 1, 1>, scalar_prefetch = 0 : i64, scratch_operands = 0 : i64, tpu.core_type = #tpu.core_type<tc>, window_params = [{transform_indices = @transform_0, window_bounds = array<i64: 8, 32>}, {transform_indices = @transform_1, window_bounds = array<i64: 1, 32, 256>}, {transform_indices = @transform_2, window_bounds = array<i64: 1, 1, 256>}, {transform_indices = @transform_3, window_bounds = array<i64: 8, 128>}]} {
    %c0 = arith.constant 0 : index
    %c0_0 = arith.constant 0 : index
    %0 = vector.load %arg2[%c0, %c0_0] : memref<8x32xf32, #tpu.memory_space<vmem>>, vector<8x32xf32>
    %c0_1 = arith.constant 0 : index
    %c0_2 = arith.constant 0 : index
    %c0_3 = arith.constant 0 : index
    %1 = vector.load %arg3[%c0_1, %c0_2, %c0_3] : memref<1x32x256xf32, #tpu.memory_space<vmem>>, vector<1x32x256xf32>
    %2 = vector.shape_cast %1 : vector<1x32x256xf32> to vector<32x256xf32>
    %cst = arith.constant dense<0.000000e+00> : vector<8x256xf32>
    %3 = tpu.matmul %0, %2, %cst {dimension_numbers = #tpu.dot_dimension_numbers<[1], [0], [0], [1], [0, 0, 1, 1], [], []>} : vector<8x32xf32>, vector<32x256xf32>, vector<8x256xf32> -> vector<8x256xf32>
    %c0_4 = arith.constant 0 : index
    %c0_5 = arith.constant 0 : index
    %c0_6 = arith.constant 0 : index
    %4 = vector.load %arg4[%c0_4, %c0_5, %c0_6] : memref<1x1x256xf32, #tpu.memory_space<vmem>>, vector<1x1x256xf32>
    %5 = vector.shape_cast %4 : vector<1x1x256xf32> to vector<1x256xf32>
    %6 = vector.broadcast %5 : vector<1x256xf32> to vector<8x256xf32>
    %7 = arith.addf %3, %6 : vector<8x256xf32>
    %8 = vector.extract_strided_slice %7 {offsets = [0, 0], sizes = [8, 128], strides = [1, 1]} : vector<8x256xf32> to vector<8x128xf32>
    %9 = math.tanh %8 : vector<8x128xf32>
    %10 = vector.extract_strided_slice %7 {offsets = [0, 128], sizes = [8, 128], strides = [1, 1]} : vector<8x256xf32> to vector<8x128xf32>
    %11 = arith.negf %10 : vector<8x128xf32>
    %12 = math.exp %11 : vector<8x128xf32>
    %cst_7 = arith.constant 1.000000e+00 : f32
    %13 = vector.broadcast %cst_7 : f32 to vector<8x128xf32>
    %14 = arith.addf %13, %12 : vector<8x128xf32>
    %15 = arith.divf %13, %14 : vector<8x128xf32>
    %16 = arith.mulf %9, %15 : vector<8x128xf32>
    %c0_8 = arith.constant 0 : index
    %c0_9 = arith.constant 0 : index
    %17 = vector.load %arg5[%c0_8, %c0_9] : memref<8x128xf32, #tpu.memory_space<vmem>>, vector<8x128xf32>
    tpu.vector_store %arg5[%c0_8, %c0_9], %16 {strides = array<i32>} : memref<8x128xf32, #tpu.memory_space<vmem>>, vector<8x128xf32>,
    return
  }
  func.func @transform_0(%arg0: i32, %arg1: i32) -> (i32, i32) {
    %c0_i32 = arith.constant 0 : i32
    %c0_i32_0 = arith.constant 0 : i32
    return %arg0, %c0_i32 : i32, i32
  }
  func.func @transform_1(%arg0: i32, %arg1: i32) -> (i32, i32, i32) {
    %c0_i32 = arith.constant 0 : i32
    %c0_i32_0 = arith.constant 0 : i32
    %c0_i32_1 = arith.constant 0 : i32
    return %arg1, %c0_i32, %c0_i32_0 : i32, i32, i32
  }
  func.func @transform_2(%arg0: i32, %arg1: i32) -> (i32, i32, i32) {
    %c0_i32 = arith.constant 0 : i32
    %c0_i32_0 = arith.constant 0 : i32
    %c0_i32_1 = arith.constant 0 : i32
    return %arg1, %c0_i32, %c0_i32_0 : i32, i32, i32
  }
  func.func @transform_3(%arg0: i32, %arg1: i32) -> (i32, i32) {
    %c0_i32 = arith.constant 0 : i32
    return %arg0, %arg1 : i32, i32
  }
}

</mosaic_0001>

<llo_original>
// kernel: tpu_custom_call.1
$region0: #{tpu_custom_call.1}
  #allocation0 [shape = 'u32[]', space=smem, size = 0x4, offset = 0x4, fixed_abs, tag = 'smem constant byte address 0x4 - core index']
  #allocation1 [shape = 'u32[72,128]{1,0:T(1,128)}', space=vmem, size = 0x9000, scoped, tag = 'internal scratch']
  %s0 = inlined_call_operand.hbm [shape: f32[8,32], index: 0, kind: input, shape index: {}]
  %s1 = inlined_call_operand.hbm [shape: f32[1,32,256], index: 1, kind: input, shape index: {}]
  %s2 = inlined_call_operand.hbm [shape: f32[1,1,256], index: 2, kind: input, shape index: {}]
  %s3 = inlined_call_operand.hbm [shape: f32[8,128], index: 3, kind: output, shape index: {}]
  %s4 = sld [smem:[#allocation0]]
  $region34: #{tpu_custom_call.1} parent=0
    _
  %s6 = ssub.s32 1, %s4
  %s7 = scalar_select 0, %s6, %s4
  $region1: #{tpu_custom_call.1} parent=0
    #allocation2 [shape = 'u8[4096]{0}', space=vmem, size = 0x1000, scoped, tag = 'input window, operand 0, single buffered']
    #allocation3 [shape = 's32[1]{0}', space=sflag, size = 0x4, scoped, tag = 'scoped memory for tpu_custom_call.1']
    #allocation4 [shape = 's32[1]{0}', space=sflag, size = 0x4, scoped, tag = 'scoped memory for tpu_custom_call.1']
    #allocation5 [shape = 'u8[32768]{0}', space=vmem, size = 0x8000, scoped, tag = 'input window, operand 1, single buffered']
    #allocation6 [shape = 's32[1]{0}', space=sflag, size = 0x4, scoped, tag = 'scoped memory for tpu_custom_call.1']
    #allocation7 [shape = 'u8[1024]{0}', space=vmem, size = 0x400, scoped, tag = 'input window, operand 2, single buffered']
    #allocation8 [shape = 'u8[4096]{0}', space=vmem, size = 0x1000, scoped, tag = 'output window, operand 0, single buffered']
    %8 = vsyncpa [#allocation3], 0
    %9 = vsyncpa [#allocation6], 0
    %10 = vsyncpa [#allocation4], 0
    // Predicated region
    $region2: #{tpu_custom_call.1} parent=1 // pred_check
      _
    $region3: #{tpu_custom_call.1} parent=1 // pred_check_branch
      %12 = sbr.rel (0) target = $region5
    $region4: #{tpu_custom_call.1} parent=1 // pred_region
      %14 = vsyncadd [#allocation3], 0
      %s16 = sshll.u32 %s0, 4
      %s17 = int_to_ptr.hbm [resolvable:$true] %s16
      %s18 = sshll.u32 [#allocation2], 4
      %s19 = int_to_ptr.vmem [resolvable:$true] %s18
      %21 = dma.hbm_to_vmem [thread:$0]  %s17, 128, %s19, [#allocation3]
    $region5: #{tpu_custom_call.1} parent=1 // pred_fallthru
      _
    // Predicated region
    $region6: #{tpu_custom_call.1} parent=1 // pred_check
      _
    $region7: #{tpu_custom_call.1} parent=1 // pred_check_branch
      %23 = sbr.rel (0) target = $region9
    $region8: #{tpu_custom_call.1} parent=1 // pred_region
      %25 = vsyncadd [#allocation6], 0
      %s26 = sshll.u32 %s1, 4
      %s27 = int_to_ptr.hbm [resolvable:$true] %s26
      %s28 = sshll.u32 [#allocation5], 4
      %s29 = int_to_ptr.vmem [resolvable:$true] %s28
      %34 = dma.hbm_to_vmem [thread:$0]  %s27, 1024, %s29, [#allocation6], 256, 256, 16
    $region9: #{tpu_custom_call.1} parent=1 // pred_fallthru
      _
    // Predicated region
    $region10: #{tpu_custom_call.1} parent=1 // pred_check
      _
    $region11: #{tpu_custom_call.1} parent=1 // pred_check_branch
      %36 = sbr.rel (0) target = $region13
    $region12: #{tpu_custom_call.1} parent=1 // pred_region
      %38 = vsyncadd [#allocation6], 0
      %s40 = sshll.u32 %s2, 4
      %s41 = int_to_ptr.hbm [resolvable:$true] %s40
      %s42 = sshll.u32 [#allocation7], 4
      %s43 = int_to_ptr.vmem [resolvable:$true] %s42
      %45 = dma.hbm_to_vmem [thread:$0]  %s41, 32, %s43, [#allocation6]
    $region13: #{tpu_custom_call.1} parent=1 // pred_fallthru
      _
    // Predicated region
    $region14: #{tpu_custom_call.1} parent=1 // pred_check
      _
    $region15: #{tpu_custom_call.1} parent=1 // pred_check_branch
      %47 = sbr.rel (0) target = $region17
    $region16: #{tpu_custom_call.1} parent=1 // pred_region
      %49 = dma.done [#allocation3], 128
    $region17: #{tpu_custom_call.1} parent=1 // pred_fallthru
      _
    // Predicated region
    $region18: #{tpu_custom_call.1} parent=1 // pred_check
      _
    $region19: #{tpu_custom_call.1} parent=1 // pred_check_branch
      %51 = sbr.rel (0) target = $region21
    $region20: #{tpu_custom_call.1} parent=1 // pred_region
      %53 = dma.done [#allocation6], 1024
    $region21: #{tpu_custom_call.1} parent=1 // pred_fallthru
      _
    // Predicated region
    $region22: #{tpu_custom_call.1} parent=1 // pred_check
      _
    $region23: #{tpu_custom_call.1} parent=1 // pred_check_branch
      %55 = sbr.rel (0) target = $region25
    $region24: #{tpu_custom_call.1} parent=1 // pred_region
      %57 = dma.done [#allocation6], 32
    $region25: #{tpu_custom_call.1} parent=1 // pred_fallthru
      _
    %v58 = vld [vmem:[#allocation2] sm:$0xff]
    %v59 = vld [vmem:[#allocation5] sm:$0xff]
    %v60 = vld [vmem:[#allocation5 + $0x8] sm:$0xff]
    %v61 = vld [vmem:[#allocation5 + $0x10] sm:$0xff]
    %v62 = vld [vmem:[#allocation5 + $0x18] sm:$0xff]
    %v63 = vld [vmem:[#allocation5 + $0x20] sm:$0xff]
    %v64 = vld [vmem:[#allocation5 + $0x28] sm:$0xff]
    %v65 = vld [vmem:[#allocation5 + $0x30] sm:$0xff]
    %v66 = vld [vmem:[#allocation5 + $0x38] sm:$0xff]
    %v67 = vld [vmem:[#allocation7] sm:$0x3]
    %v69 = vperm.slane %v67, 0
    %v70 = vperm.slane %v67, 1
    %vm73 = vcmask 261120
    %v75 = vsel %vm73, %v58, 0
    %77 = vmatpush.msra.mxu0 0.0
    %78 = vmatpush.msra.mxu0 0.0
    %79 = vmatpush.msra.mxu0 0.0
    %80 = vmatpush.msra.mxu0 0.0
    %81 = vmatpush.msra.mxu0 0.0
    %82 = vmatpush.msra.mxu0 0.0
    %83 = vmatpush.msra.mxu0 0.0
    %84 = vmatpush.msra.mxu0 0.0
    %85 = vmatpush.msra.mxu0 0.0
    %86 = vmatpush.msra.mxu0 0.0
    %87 = vmatpush.msra.mxu0 0.0
    %88 = vmatpush.msra.mxu0 0.0
    %89 = vmatpush.msra.mxu0 %v65
    %90 = vmatpush.msra.mxu0 %v63
    %91 = vmatpush.msra.mxu0 %v61
    %92 = vmatpush.msra.mxu0 %v59
    %93 = vmatmul.f32.gmra.mxu0 %v75
    %v94 = vpop.f32.mrf.mxu0
    %v95 = vadd.f32 %v69, %v94
    %96 = vdwg.mxu0
    %97 = vmatpush.msra.mxu0 0.0
    %98 = vmatpush.msra.mxu0 0.0
    %99 = vmatpush.msra.mxu0 0.0
    %100 = vmatpush.msra.mxu0 0.0
    %101 = vmatpush.msra.mxu0 0.0
    %102 = vmatpush.msra.mxu0 0.0
    %103 = vmatpush.msra.mxu0 0.0
    %104 = vmatpush.msra.mxu0 0.0
    %105 = vmatpush.msra.mxu0 0.0
    %106 = vmatpush.msra.mxu0 0.0
    %107 = vmatpush.msra.mxu0 0.0
    %108 = vmatpush.msra.mxu0 0.0
    %109 = vmatpush.msra.mxu0 %v66
    %110 = vmatpush.msra.mxu0 %v64
    %111 = vmatpush.msra.mxu0 %v62
    %112 = vmatpush.msra.mxu0 %v60
    %113 = vmatmul.f32.gmra.mxu0 %v75
    %v114 = vpop.f32.mrf.mxu0
    %v115 = vadd.f32 %v70, %v114
    %116 = vdwg.mxu0
    %v117 = vtanh.pop %v95
    %v118 = vxor.u32 %v115, 2147483648
    %v119 = vmul.f32 %v118, 1.442695
    %v120 = vpow.pop %v119
    %v121 = vadd.f32 %v120, 1.0
    %v122 = vrcp.pop %v121
    %v123 = vmul.f32 %v121, %v122
    %v124 = vsub.f32 1.0, %v123
    %v125 = vmul.f32 %v122, %v124
    %v126 = vadd.f32 %v122, %v125
    %vm127 = vweird.f32 %v121
    %vm128 = vweird.f32 %v122
    %vm129 = vmor %vm127, %vm128
    %v130 = vsel %vm129, %v122, %v126
    %v131 = vand.u32 2147483647, %v121
    %vm132 = vcmp.eq.f32.partialorder %v131, 8.507059e+37
    %v133 = vand.u32 %v121, 2147483648
    %v134 = vor.u32 1.1754944e-38, %v133
    %v135 = vsel %vm132, %v134, %v130
    %v136 = vmul.f32 1.0, %v135
    %v137 = vmul.f32 %v117, %v136
    %138 = vst [vmem:[#allocation8] sm:$0xff] %v137
    // Predicated region
    $region26: #{tpu_custom_call.1} parent=1 // pred_check
      _
    $region27: #{tpu_custom_call.1} parent=1 // pred_check_branch
      %140 = sbr.rel (0) target = $region29
    $region28: #{tpu_custom_call.1} parent=1 // pred_region
      %142 = vsyncadd [#allocation4], 0
      %s144 = sshll.u32 [#allocation8], 4
      %s145 = int_to_ptr.vmem [resolvable:$true] %s144
      %s146 = sshll.u32 %s3, 4
      %s147 = int_to_ptr.hbm [resolvable:$true] %s146
      %149 = dma.vmem_to_hbm [thread:$0]  %s145, 128, %s147, [#allocation4]
    $region29: #{tpu_custom_call.1} parent=1 // pred_fallthru
      _
    // Predicated region
    $region30: #{tpu_custom_call.1} parent=1 // pred_check
      _
    $region31: #{tpu_custom_call.1} parent=1 // pred_check_branch
      %151 = sbr.rel (0) target = $region33
    $region32: #{tpu_custom_call.1} parent=1 // pred_region
      %153 = dma.done [#allocation4], 128
    $region33: #{tpu_custom_call.1} parent=1 // pred_fallthru
      _
    %154 = vsyncpa [#allocation3], 1
    %155 = vsyncpa [#allocation6], 1
    %156 = vsyncpa [#allocation4], 1

</llo_original>
